<compile_context>
chip_gen: v5e
topology: v5e:2x2
jax: 0.10.0
libtpu: 0.0.40
codegen_flags: <defaults>
</compile_context>

<pallas_src>
import functools

import jax
import jax.numpy as jnp
from jax import lax
from jax.experimental import pallas as pl
from jax.experimental.pallas import tpu as pltpu


def _exact_divmod_consts(d, max_idx):
    """(shift, mult) such that  i // d == (i * mult) >> shift  exactly
    for all 0 <= i <= max_idx (and i * mult stays inside int32)."""
    for shift in range(16, 31):
        mult = (1 << shift) // d + 1
        err = mult * d - (1 << shift)
        if (max_idx // d) * err + (d - 1) * mult < (1 << shift) and max_idx * mult < 2 ** 31:
            return shift, mult
    raise ValueError(f"no exact multiply-shift division for d={d}, max_idx={max_idx}")


def _boundary_weight_and_mask(idx, d):
    """TV weight (2 at idx==0 / idx==d-2, 1 elsewhere, 0 at the invalid
    idx==d-1 position) and the 0/1 validity mask for the monotonicity term."""
    m = jnp.where(idx == d - 1, 0.0, 1.0)
    w = m + jnp.where(idx == 0, 1.0, 0.0) + jnp.where(idx == d - 2, 1.0, 0.0)
    return w, m


def _tv3dlut_kernel(x_ref, out_ref, *, dim, lane_mult, lane_shift,
                    row_mult, row_shift):
    D = dim
    DD = D * D          # lane extent of the LUT slab (lane l = g*D + r)
    S = 3 * D           # sublane extent              (row  s = c*D + b)

    # ---------------- r-direction: pairs (l, l+1) over lanes 0..DD-2 ----------
    # positions with r == D-1 pair across a g-boundary -> zero-weighted
    lane = lax.broadcasted_iota(jnp.int32, (1, DD - 1), 1)
    g_of_l = (lane * lane_mult) >> lane_shift          # exact lane // D
    r_of_l = lane - g_of_l * D                         # exact lane %  D
    wr, mr = _boundary_weight_and_mask(r_of_l, D)

    x_lo = x_ref[pl.ds(0, S), pl.ds(0, DD - 1)]
    x_hi = x_ref[pl.ds(0, S), pl.ds(1, DD - 1)]
    d = x_lo - x_hi
    tv = jnp.sum(d * d * wr)
    mn = jnp.sum(jnp.maximum(d, 0.0) * mr)

    # ---------------- g-direction: pairs (l, l+D) over lanes 0..DD-D-1 --------
    # every pair is valid (g <= D-2 by construction): no mask, and the weight
    # only needs two range compares (g==0 <=> l < D, g==D-2 <=> l >= (D-2)*D).
    lane_g = lax.broadcasted_iota(jnp.int32, (1, DD - D), 1)
    wg = (1.0 + jnp.where(lane_g < D, 1.0, 0.0)
          + jnp.where(lane_g >= (D - 2) * D, 1.0, 0.0))

    x_lo = x_ref[pl.ds(0, S), pl.ds(0, DD - D)]
    x_hi = x_ref[pl.ds(0, S), pl.ds(D, DD - D)]
    d = x_lo - x_hi
    tv = tv + jnp.sum(d * d * wg)
    mn = mn + jnp.sum(jnp.maximum(d, 0.0))

    # ---------------- b-direction: row pairs (s, s+1) over rows 0..S-2 --------
    # positions with b == D-1 pair across a channel boundary -> zero-weighted
    row = lax.broadcasted_iota(jnp.int32, (S - 1, 1), 0)
    c_of_s = (row * row_mult) >> row_shift             # exact row // D
    b_of_s = row - c_of_s * D                          # exact row %  D
    wb, mb = _boundary_weight_and_mask(b_of_s, D)

    x_lo = x_ref[pl.ds(0, S - 1), pl.ds(0, DD)]
    x_hi = x_ref[pl.ds(1, S - 1), pl.ds(0, DD)]
    d = x_lo - x_hi
    tv = tv + jnp.sum(d * d * wb)
    mn = mn + jnp.sum(jnp.maximum(d, 0.0) * mb)

    # all three torch means share the same element count 3*D*D*(D-1)
    inv_n = jnp.float32(1.0 / (3 * D * D * (D - 1)))
    out_ref[0] = tv * inv_n
    out_ref[1] = mn * inv_n


@jax.jit
def tv_3d_lut_forward(lut):
    """Returns (tv, mn) scalars, matching TV_3D_LUT.forward(LUT).

    lut: (3, dim, dim, dim) float in the PyTorch (C, B, G, R) axis order.
    """
    c, D, D2, D3 = lut.shape
    assert c == 3 and D == D2 == D3 and D >= 3
    DD = D * D
    S = 3 * D

    lane_shift, lane_mult = _exact_divmod_consts(D, DD - 1)
    row_shift, row_mult = _exact_divmod_consts(D, S - 1)

    # free contiguous re-layout (a bitcast under jit): rows = c*D + b (sublanes),
    # lanes = g*D + r (lane-dense).  No padding, no extra XLA kernel.
    x2d = lut.astype(jnp.float32).reshape(S, DD)

    out = pl.pallas_call(
        functools.partial(_tv3dlut_kernel, dim=D,
                          lane_mult=lane_mult, lane_shift=lane_shift,
                          row_mult=row_mult, row_shift=row_shift),
        out_shape=jax.ShapeDtypeStruct((2,), jnp.float32),
        in_specs=[pl.BlockSpec(memory_space=pltpu.MemorySpace.VMEM)],
        out_specs=pl.BlockSpec(memory_space=pltpu.MemorySpace.SMEM),
    )(x2d)
    return out[0], out[1]


# ---------------------------- reference (pure JAX, mirrors the torch module) --
def _make_weights(D):
    w_r = jnp.ones((3, D, D, D - 1), jnp.float32)
    w_r = w_r.at[:, :, :, 0].multiply(2.0).at[:, :, :, D - 2].multiply(2.0)
    w_g = jnp.ones((3, D, D - 1, D), jnp.float32)
    w_g = w_g.at[:, :, 0, :].multiply(2.0).at[:, :, D - 2, :].multiply(2.0)
    w_b = jnp.ones((3, D - 1, D, D), jnp.float32)
    w_b = w_b.at[:, 0, :, :].multiply(2.0).at[:, D - 2, :, :].multiply(2.0)
    return w_r, w_g, w_b


def _reference(lut):
    D = lut.shape[1]
    w_r, w_g, w_b = _make_weights(D)
    dif_r = lut[:, :, :, :-1] - lut[:, :, :, 1:]
    dif_g = lut[:, :, :-1, :] - lut[:, :, 1:, :]
    dif_b = lut[:, :-1, :, :] - lut[:, 1:, :, :]
    tv = (jnp.mean(dif_r ** 2 * w_r) + jnp.mean(dif_g ** 2 * w_g)
          + jnp.mean(dif_b ** 2 * w_b))
    mn = (jnp.mean(jnp.maximum(dif_r, 0.0)) + jnp.mean(jnp.maximum(dif_g, 0.0))
          + jnp.mean(jnp.maximum(dif_b, 0.0)))
    return tv, mn


if __name__ == "__main__":
    key = jax.random.PRNGKey(0)
    for dim in (17, 33):  # 33 is the module default; 17 is a small variant
        key, sub = jax.random.split(key)
        lut = jax.random.normal(sub, (3, dim, dim, dim), dtype=jnp.float32)

        tv, mn = tv_3d_lut_forward(lut)
        tv, mn = jax.block_until_ready((tv, mn))

        tv_ref, mn_ref = _reference(lut)
        assert jnp.allclose(tv, tv_ref, rtol=1e-4, atol=1e-5), (dim, tv, tv_ref)
        assert jnp.allclose(mn, mn_ref, rtol=1e-4, atol=1e-5), (dim, mn, mn_ref)

    print("KERNEL_OK")
</pallas_src>

<mosaic_0001>
module attributes {stable_mosaic.version = 11 : i64} {
  func.func @_tv3dlut_kernel(%arg0: memref<51x289xf32, #tpu.memory_space<vmem>>, %arg1: memref<2xf32, #tpu.memory_space<smem>>) attributes {dimension_semantics = [], scalar_prefetch = 0 : i64, scratch_operands = 0 : i64, tpu.core_type = #tpu.core_type<tc>} {
    %0 = tpu.iota {dimensions = array<i32: 1>} : vector<1x288xi32>
    %c3856_i32 = arith.constant 3856 : i32
    %1 = vector.broadcast %c3856_i32 : i32 to vector<1x288xi32>
    %2 = arith.muli %0, %1 : vector<1x288xi32>
    %c16_i32 = arith.constant 16 : i32
    %3 = vector.broadcast %c16_i32 : i32 to vector<1x288xi32>
    %4 = arith.shrsi %2, %3 : vector<1x288xi32>
    %c17_i32 = arith.constant 17 : i32
    %5 = vector.broadcast %c17_i32 : i32 to vector<1x288xi32>
    %6 = arith.muli %4, %5 : vector<1x288xi32>
    %7 = arith.subi %0, %6 : vector<1x288xi32>
    %c16_i32_0 = arith.constant 16 : i32
    %8 = vector.broadcast %c16_i32_0 : i32 to vector<1x288xi32>
    %9 = arith.cmpi eq, %7, %8 : vector<1x288xi32>
    %cst = arith.constant 0.000000e+00 : f32
    %cst_1 = arith.constant 1.000000e+00 : f32
    %10 = vector.broadcast %cst : f32 to vector<1x288xf32>
    %11 = vector.broadcast %cst_1 : f32 to vector<1x288xf32>
    %12 = arith.select %9, %10, %11 : vector<1x288xi1>, vector<1x288xf32>
    %c0_i32 = arith.constant 0 : i32
    %13 = vector.broadcast %c0_i32 : i32 to vector<1x288xi32>
    %14 = arith.cmpi eq, %7, %13 : vector<1x288xi32>
    %cst_2 = arith.constant 1.000000e+00 : f32
    %cst_3 = arith.constant 0.000000e+00 : f32
    %15 = vector.broadcast %cst_2 : f32 to vector<1x288xf32>
    %16 = vector.broadcast %cst_3 : f32 to vector<1x288xf32>
    %17 = arith.select %14, %15, %16 : vector<1x288xi1>, vector<1x288xf32>
    %18 = arith.addf %12, %17 : vector<1x288xf32>
    %c15_i32 = arith.constant 15 : i32
    %19 = vector.broadcast %c15_i32 : i32 to vector<1x288xi32>
    %20 = arith.cmpi eq, %7, %19 : vector<1x288xi32>
    %cst_4 = arith.constant 1.000000e+00 : f32
    %cst_5 = arith.constant 0.000000e+00 : f32
    %21 = vector.broadcast %cst_4 : f32 to vector<1x288xf32>
    %22 = vector.broadcast %cst_5 : f32 to vector<1x288xf32>
    %23 = arith.select %20, %21, %22 : vector<1x288xi1>, vector<1x288xf32>
    %24 = arith.addf %18, %23 : vector<1x288xf32>
    %c0 = arith.constant 0 : index
    %c0_6 = arith.constant 0 : index
    %25 = vector.load %arg0[%c0, %c0_6] : memref<51x289xf32, #tpu.memory_space<vmem>>, vector<51x288xf32>
    %c0_7 = arith.constant 0 : index
    %c1 = arith.constant 1 : index
    %26 = vector.load %arg0[%c0_7, %c1] : memref<51x289xf32, #tpu.memory_space<vmem>>, vector<51x288xf32>
    %27 = arith.subf %25, %26 : vector<51x288xf32>
    %28 = arith.mulf %27, %27 : vector<51x288xf32>
    %29 = vector.broadcast %24 : vector<1x288xf32> to vector<51x288xf32>
    %30 = arith.mulf %28, %29 : vector<51x288xf32>
    %31 = vector.shape_cast %30 : vector<51x288xf32> to vector<1x51x288xf32>
    %cst_8 = arith.constant dense<0.000000e+00> : vector<1xf32>
    %32 = vector.multi_reduction <add>, %31, %cst_8 [1, 2] : vector<1x51x288xf32> to vector<1xf32>
    %33 = vector.shape_cast %32 : vector<1xf32> to vector<1x1x1xf32>
    %34 = vector.extract %33[0, 0, 0] : f32 from vector<1x1x1xf32>
    %cst_9 = arith.constant 0.000000e+00 : f32
    %35 = vector.broadcast %cst_9 : f32 to vector<51x288xf32>
    %36 = arith.maximumf %27, %35 : vector<51x288xf32>
    %37 = vector.broadcast %12 : vector<1x288xf32> to vector<51x288xf32>
    %38 = arith.mulf %36, %37 : vector<51x288xf32>
    %39 = vector.shape_cast %38 : vector<51x288xf32> to vector<1x51x288xf32>
    %cst_10 = arith.constant dense<0.000000e+00> : vector<1xf32>
    %40 = vector.multi_reduction <add>, %39, %cst_10 [1, 2] : vector<1x51x288xf32> to vector<1xf32>
    %41 = vector.shape_cast %40 : vector<1xf32> to vector<1x1x1xf32>
    %42 = vector.extract %41[0, 0, 0] : f32 from vector<1x1x1xf32>
    %43 = tpu.iota {dimensions = array<i32: 1>} : vector<1x272xi32>
    %c17_i32_11 = arith.constant 17 : i32
    %44 = vector.broadcast %c17_i32_11 : i32 to vector<1x272xi32>
    %45 = arith.cmpi slt, %43, %44 : vector<1x272xi32>
    %cst_12 = arith.constant 1.000000e+00 : f32
    %cst_13 = arith.constant 0.000000e+00 : f32
    %46 = vector.broadcast %cst_12 : f32 to vector<1x272xf32>
    %47 = vector.broadcast %cst_13 : f32 to vector<1x272xf32>
    %48 = arith.select %45, %46, %47 : vector<1x272xi1>, vector<1x272xf32>
    %cst_14 = arith.constant 1.000000e+00 : f32
    %49 = vector.broadcast %cst_14 : f32 to vector<1x272xf32>
    %50 = arith.addf %49, %48 : vector<1x272xf32>
    %c255_i32 = arith.constant 255 : i32
    %51 = vector.broadcast %c255_i32 : i32 to vector<1x272xi32>
    %52 = arith.cmpi sge, %43, %51 : vector<1x272xi32>
    %cst_15 = arith.constant 1.000000e+00 : f32
    %cst_16 = arith.constant 0.000000e+00 : f32
    %53 = vector.broadcast %cst_15 : f32 to vector<1x272xf32>
    %54 = vector.broadcast %cst_16 : f32 to vector<1x272xf32>
    %55 = arith.select %52, %53, %54 : vector<1x272xi1>, vector<1x272xf32>
    %56 = arith.addf %50, %55 : vector<1x272xf32>
    %c0_17 = arith.constant 0 : index
    %c0_18 = arith.constant 0 : index
    %57 = vector.load %arg0[%c0_17, %c0_18] : memref<51x289xf32, #tpu.memory_space<vmem>>, vector<51x272xf32>
    %c0_19 = arith.constant 0 : index
    %c17 = arith.constant 17 : index
    %58 = vector.load %arg0[%c0_19, %c17] : memref<51x289xf32, #tpu.memory_space<vmem>>, vector<51x272xf32>
    %59 = arith.subf %57, %58 : vector<51x272xf32>
    %60 = arith.mulf %59, %59 : vector<51x272xf32>
    %61 = vector.broadcast %56 : vector<1x272xf32> to vector<51x272xf32>
    %62 = arith.mulf %60, %61 : vector<51x272xf32>
    %63 = vector.shape_cast %62 : vector<51x272xf32> to vector<1x51x272xf32>
    %cst_20 = arith.constant dense<0.000000e+00> : vector<1xf32>
    %64 = vector.multi_reduction <add>, %63, %cst_20 [1, 2] : vector<1x51x272xf32> to vector<1xf32>
    %65 = vector.shape_cast %64 : vector<1xf32> to vector<1x1x1xf32>
    %66 = vector.extract %65[0, 0, 0] : f32 from vector<1x1x1xf32>
    %67 = arith.addf %34, %66 : f32
    %cst_21 = arith.constant 0.000000e+00 : f32
    %68 = vector.broadcast %cst_21 : f32 to vector<51x272xf32>
    %69 = arith.maximumf %59, %68 : vector<51x272xf32>
    %70 = vector.shape_cast %69 : vector<51x272xf32> to vector<1x51x272xf32>
    %cst_22 = arith.constant dense<0.000000e+00> : vector<1xf32>
    %71 = vector.multi_reduction <add>, %70, %cst_22 [1, 2] : vector<1x51x272xf32> to vector<1xf32>
    %72 = vector.shape_cast %71 : vector<1xf32> to vector<1x1x1xf32>
    %73 = vector.extract %72[0, 0, 0] : f32 from vector<1x1x1xf32>
    %74 = arith.addf %42, %73 : f32
    %75 = tpu.iota {dimensions = array<i32: 0>} : vector<50x1xi32>
    %c3856_i32_23 = arith.constant 3856 : i32
    %76 = vector.broadcast %c3856_i32_23 : i32 to vector<50x1xi32>
    %77 = arith.muli %75, %76 : vector<50x1xi32>
    %c16_i32_24 = arith.constant 16 : i32
    %78 = vector.broadcast %c16_i32_24 : i32 to vector<50x1xi32>
    %79 = arith.shrsi %77, %78 : vector<50x1xi32>
    %c17_i32_25 = arith.constant 17 : i32
    %80 = vector.broadcast %c17_i32_25 : i32 to vector<50x1xi32>
    %81 = arith.muli %79, %80 : vector<50x1xi32>
    %82 = arith.subi %75, %81 : vector<50x1xi32>
    %c16_i32_26 = arith.constant 16 : i32
    %83 = vector.broadcast %c16_i32_26 : i32 to vector<50x1xi32>
    %84 = arith.cmpi eq, %82, %83 : vector<50x1xi32>
    %cst_27 = arith.constant 0.000000e+00 : f32
    %cst_28 = arith.constant 1.000000e+00 : f32
    %85 = vector.broadcast %cst_27 : f32 to vector<50x1xf32>
    %86 = vector.broadcast %cst_28 : f32 to vector<50x1xf32>
    %87 = arith.select %84, %85, %86 : vector<50x1xi1>, vector<50x1xf32>
    %c0_i32_29 = arith.constant 0 : i32
    %88 = vector.broadcast %c0_i32_29 : i32 to vector<50x1xi32>
    %89 = arith.cmpi eq, %82, %88 : vector<50x1xi32>
    %cst_30 = arith.constant 1.000000e+00 : f32
    %cst_31 = arith.constant 0.000000e+00 : f32
    %90 = vector.broadcast %cst_30 : f32 to vector<50x1xf32>
    %91 = vector.broadcast %cst_31 : f32 to vector<50x1xf32>
    %92 = arith.select %89, %90, %91 : vector<50x1xi1>, vector<50x1xf32>
    %93 = arith.addf %87, %92 : vector<50x1xf32>
    %c15_i32_32 = arith.constant 15 : i32
    %94 = vector.broadcast %c15_i32_32 : i32 to vector<50x1xi32>
    %95 = arith.cmpi eq, %82, %94 : vector<50x1xi32>
    %cst_33 = arith.constant 1.000000e+00 : f32
    %cst_34 = arith.constant 0.000000e+00 : f32
    %96 = vector.broadcast %cst_33 : f32 to vector<50x1xf32>
    %97 = vector.broadcast %cst_34 : f32 to vector<50x1xf32>
    %98 = arith.select %95, %96, %97 : vector<50x1xi1>, vector<50x1xf32>
    %99 = arith.addf %93, %98 : vector<50x1xf32>
    %c0_35 = arith.constant 0 : index
    %c0_36 = arith.constant 0 : index
    %100 = vector.load %arg0[%c0_35, %c0_36] : memref<51x289xf32, #tpu.memory_space<vmem>>, vector<50x289xf32>
    %c1_37 = arith.constant 1 : index
    %c0_38 = arith.constant 0 : index
    %101 = vector.load %arg0[%c1_37, %c0_38] : memref<51x289xf32, #tpu.memory_space<vmem>>, vector<50x289xf32>
    %102 = arith.subf %100, %101 : vector<50x289xf32>
    %103 = arith.mulf %102, %102 : vector<50x289xf32>
    %104 = vector.broadcast %99 : vector<50x1xf32> to vector<50x289xf32>
    %105 = arith.mulf %103, %104 : vector<50x289xf32>
    %106 = vector.shape_cast %105 : vector<50x289xf32> to vector<1x50x289xf32>
    %cst_39 = arith.constant dense<0.000000e+00> : vector<1xf32>
    %107 = vector.multi_reduction <add>, %106, %cst_39 [1, 2] : vector<1x50x289xf32> to vector<1xf32>
    %108 = vector.shape_cast %107 : vector<1xf32> to vector<1x1x1xf32>
    %109 = vector.extract %108[0, 0, 0] : f32 from vector<1x1x1xf32>
    %110 = arith.addf %67, %109 : f32
    %cst_40 = arith.constant 0.000000e+00 : f32
    %111 = vector.broadcast %cst_40 : f32 to vector<50x289xf32>
    %112 = arith.maximumf %102, %111 : vector<50x289xf32>
    %113 = vector.broadcast %87 : vector<50x1xf32> to vector<50x289xf32>
    %114 = arith.mulf %112, %113 : vector<50x289xf32>
    %115 = vector.shape_cast %114 : vector<50x289xf32> to vector<1x50x289xf32>
    %cst_41 = arith.constant dense<0.000000e+00> : vector<1xf32>
    %116 = vector.multi_reduction <add>, %115, %cst_41 [1, 2] : vector<1x50x289xf32> to vector<1xf32>
    %117 = vector.shape_cast %116 : vector<1xf32> to vector<1x1x1xf32>
    %118 = vector.extract %117[0, 0, 0] : f32 from vector<1x1x1xf32>
    %119 = arith.addf %74, %118 : f32
    %cst_42 = arith.constant 7.2087656E-5 : f32
    %120 = arith.mulf %110, %cst_42 : f32
    %c0_43 = arith.constant 0 : index
    %121 = memref.load %arg1[%c0_43] : memref<2xf32, #tpu.memory_space<smem>>
    memref.store %120, %arg1[%c0_43] : memref<2xf32, #tpu.memory_space<smem>>
    %cst_44 = arith.constant 7.2087656E-5 : f32
    %122 = arith.mulf %119, %cst_44 : f32
    %c1_45 = arith.constant 1 : index
    %123 = memref.load %arg1[%c1_45] : memref<2xf32, #tpu.memory_space<smem>>
    memref.store %122, %arg1[%c1_45] : memref<2xf32, #tpu.memory_space<smem>>
    return
  }
}

</mosaic_0001>

<llo_original>
// kernel: tv_3d_lut_forward.1
$region0: #{tv_3d_lut_forward.1}
  #allocation0 [shape = 'u32[]', space=smem, size = 0x4, offset = 0x4, fixed_abs, tag = 'smem constant byte address 0x4 - core index']
  #allocation1 [shape = 'u32[72,128]{1,0:T(1,128)}', space=vmem, size = 0x9000, scoped, tag = 'internal scratch']
  %s0 = inlined_call_operand.vmem [shape: f32[51,289], index: 0, kind: input, shape index: {}]
  %s1 = inlined_call_operand.vmem [shape: f32[2], index: 1, kind: output, shape index: {}]
  %s2 = sld [smem:[#allocation0]]
  $region14: #{tv_3d_lut_forward.1} parent=0
    _
  %s4 = ssub.s32 1, %s2
  %s5 = scalar_select 0, %s4, %s2
  $region1: #{tv_3d_lut_forward.1} parent=0
    #allocation2 [shape = 'u8[512]{0}', space=smem, size = 0x200, scoped, tag = 'output window, operand 0, single buffered']
    #allocation3 [shape = 's32[1]{0}', space=sflag, size = 0x4, scoped, tag = 'scoped memory for tv_3d_lut_forward.1']
    %6 = vsyncpa [#allocation3], 0
    // Predicated region
    $region2: #{tv_3d_lut_forward.1} parent=1 // pred_check
      _
    $region3: #{tv_3d_lut_forward.1} parent=1 // pred_check_branch
      %8 = sbr.rel (0) target = $region5
    $region4: #{tv_3d_lut_forward.1} parent=1 // pred_region
      _
    $region5: #{tv_3d_lut_forward.1} parent=1 // pred_fallthru
      _
    %v9 = vlaneseq
    %v10 = vand.u32 %v9, 127
    %v11 = vadd.s32 %v10, 128
    %v12 = vadd.s32 %v10, 256
    %v13 = vmul.u32 %v10, 3856
    %v14 = vmul.u32 %v11, 3856
    %v15 = vmul.u32 %v12, 3856
    %v16 = vshra.s32 %v13, 16
    %v17 = vshra.s32 %v14, 16
    %v18 = vshra.s32 %v15, 16
    %v19 = vmul.u32 %v16, 17
    %v20 = vmul.u32 %v17, 17
    %v21 = vmul.u32 %v18, 17
    %v22 = vsub.s32 %v10, %v19
    %v23 = vsub.s32 %v11, %v20
    %v24 = vsub.s32 %v12, %v21
    %vm25 = vcmp.eq.s32.totalorder %v22, 16
    %vm26 = vcmp.eq.s32.totalorder %v23, 16
    %vm27 = vcmp.eq.s32.totalorder %v24, 16
    %v28 = vsel %vm25, 0.0, 1.0
    %v29 = vsel %vm26, 0.0, 1.0
    %v30 = vsel %vm27, 0.0, 1.0
    %vm31 = vcmp.eq.s32.totalorder %v22, 0
    %vm32 = vcmp.eq.s32.totalorder %v23, 0
    %vm33 = vcmp.eq.s32.totalorder %v24, 0
    %v34 = vsel %vm31, 1.0, 0.0
    %v35 = vsel %vm32, 1.0, 0.0
    %v36 = vsel %vm33, 1.0, 0.0
    %v37 = vadd.f32 %v28, %v34
    %v38 = vadd.f32 %v29, %v35
    %v39 = vadd.f32 %v30, %v36
    %vm40 = vcmp.eq.s32.totalorder %v22, 15
    %vm41 = vcmp.eq.s32.totalorder %v23, 15
    %vm42 = vcmp.eq.s32.totalorder %v24, 15
    %v43 = vsel %vm40, 1.0, 0.0
    %v44 = vsel %vm41, 1.0, 0.0
    %v45 = vsel %vm42, 1.0, 0.0
    %v46 = vadd.f32 %v37, %v43
    %v47 = vadd.f32 %v38, %v44
    %v48 = vadd.f32 %v39, %v45
    %v49 = vld [vmem:[%s0] sm:$0xff]
    %v50 = vld [vmem:[%s0 + $0x8] sm:$0xff]
    %v51 = vld [vmem:[%s0 + $0x10] sm:$0xff]
    %v52 = vld [vmem:[%s0 + $0x18] sm:$0xff]
    %v53 = vld [vmem:[%s0 + $0x20] sm:$0xff]
    %v54 = vld [vmem:[%s0 + $0x28] sm:$0xff]
    %v55 = vld [vmem:[%s0 + $0x30] sm:$0xff]
    %v56 = vld [vmem:[%s0 + $0x38] sm:$0xff]
    %v57 = vld [vmem:[%s0 + $0x40] sm:$0xff]
    %v58 = vld [vmem:[%s0 + $0x48] sm:$0xff]
    %v59 = vld [vmem:[%s0 + $0x50] sm:$0xff]
    %v60 = vld [vmem:[%s0 + $0x58] sm:$0xff]
    %v61 = vld [vmem:[%s0 + $0x60] sm:$0xff]
    %v62 = vld [vmem:[%s0 + $0x68] sm:$0xff]
    %v63 = vld [vmem:[%s0 + $0x70] sm:$0xff]
    %v64 = vld [vmem:[%s0 + $0x78] sm:$0xff]
    %v65 = vld [vmem:[%s0 + $0x80] sm:$0xff]
    %v66 = vld [vmem:[%s0 + $0x88] sm:$0xff]
    %v67 = vld [vmem:[%s0 + $0x90] sm:$0x7]
    %v68 = vld [vmem:[%s0 + $0x98] sm:$0x7]
    %v69 = vld [vmem:[%s0 + $0xa0] sm:$0x7]
    %91 = vrot.lane.b32.xlu0 %v49, 127
    %v92 = vpop.permute.xlu0 %91
    %93 = vrot.lane.b32.xlu0 %v50, 127
    %v94 = vpop.permute.xlu0 %93
    %95 = vrot.lane.b32.xlu0 %v51, 127
    %v96 = vpop.permute.xlu0 %95
    %97 = vrot.lane.b32.xlu0 %v52, 127
    %v98 = vpop.permute.xlu0 %97
    %99 = vrot.lane.b32.xlu0 %v53, 127
    %v100 = vpop.permute.xlu0 %99
    %101 = vrot.lane.b32.xlu0 %v54, 127
    %v102 = vpop.permute.xlu0 %101
    %103 = vrot.lane.b32.xlu0 %v55, 127
    %v104 = vpop.permute.xlu0 %103
    %105 = vrot.lane.b32.xlu0 %v56, 127
    %v106 = vpop.permute.xlu0 %105
    %107 = vrot.lane.b32.xlu0 %v57, 127
    %v108 = vpop.permute.xlu0 %107
    %109 = vrot.lane.b32.xlu0 %v58, 127
    %v110 = vpop.permute.xlu0 %109
    %111 = vrot.lane.b32.xlu0 %v59, 127
    %v112 = vpop.permute.xlu0 %111
    %113 = vrot.lane.b32.xlu0 %v60, 127
    %v114 = vpop.permute.xlu0 %113
    %115 = vrot.lane.b32.xlu0 %v61, 127
    %v116 = vpop.permute.xlu0 %115
    %117 = vrot.lane.b32.xlu0 %v62, 127
    %v118 = vpop.permute.xlu0 %117
    %119 = vrot.lane.b32.xlu0 %v63, 127
    %v120 = vpop.permute.xlu0 %119
    %121 = vrot.lane.b32.xlu0 %v64, 127
    %v122 = vpop.permute.xlu0 %121
    %123 = vrot.lane.b32.xlu0 %v65, 127
    %v124 = vpop.permute.xlu0 %123
    %125 = vrot.lane.b32.xlu0 %v66, 127
    %v126 = vpop.permute.xlu0 %125
    %127 = vrot.lane.b32.xlu0 %v67, 127
    %v128 = vpop.permute.xlu0 %127
    %129 = vrot.lane.b32.xlu0 %v68, 127
    %v130 = vpop.permute.xlu0 %129
    %131 = vrot.lane.b32.xlu0 %v69, 127
    %v132 = vpop.permute.xlu0 %131
    %vm133 = vcmask 1039360
    %v134 = vsel %vm133, %v92, %v94
    %v135 = vsel %vm133, %v94, %v96
    %v136 = vsel %vm133, %v98, %v100
    %v137 = vsel %vm133, %v100, %v102
    %v138 = vsel %vm133, %v104, %v106
    %v139 = vsel %vm133, %v106, %v108
    %v140 = vsel %vm133, %v110, %v112
    %v141 = vsel %vm133, %v112, %v114
    %v142 = vsel %vm133, %v116, %v118
    %v143 = vsel %vm133, %v118, %v120
    %v144 = vsel %vm133, %v122, %v124
    %v145 = vsel %vm133, %v124, %v126
    %v146 = vsel %vm133, %v128, %v130
    %v147 = vsel %vm133, %v130, %v132
    %v169 = vsub.f32 %v49, %v134
    %v170 = vsub.f32 %v50, %v135
    %v171 = vsub.f32 %v51, %v96
    %v172 = vsub.f32 %v52, %v136
    %v173 = vsub.f32 %v53, %v137
    %v174 = vsub.f32 %v54, %v102
    %v175 = vsub.f32 %v55, %v138
    %v176 = vsub.f32 %v56, %v139
    %v177 = vsub.f32 %v57, %v108
    %v178 = vsub.f32 %v58, %v140
    %v179 = vsub.f32 %v59, %v141
    %v180 = vsub.f32 %v60, %v114
    %v181 = vsub.f32 %v61, %v142
    %v182 = vsub.f32 %v62, %v143
    %v183 = vsub.f32 %v63, %v120
    %v184 = vsub.f32 %v64, %v144
    %v185 = vsub.f32 %v65, %v145
    %v186 = vsub.f32 %v66, %v126
    %v187 = vsub.f32 %v67, %v146
    %v188 = vsub.f32 %v68, %v147
    %v189 = vsub.f32 %v69, %v132
    %v190 = vmul.f32 %v169, %v169
    %v191 = vmul.f32 %v170, %v170
    %v192 = vmul.f32 %v171, %v171
    %v193 = vmul.f32 %v172, %v172
    %v194 = vmul.f32 %v173, %v173
    %v195 = vmul.f32 %v174, %v174
    %v196 = vmul.f32 %v175, %v175
    %v197 = vmul.f32 %v176, %v176
    %v198 = vmul.f32 %v177, %v177
    %v199 = vmul.f32 %v178, %v178
    %v200 = vmul.f32 %v179, %v179
    %v201 = vmul.f32 %v180, %v180
    %v202 = vmul.f32 %v181, %v181
    %v203 = vmul.f32 %v182, %v182
    %v204 = vmul.f32 %v183, %v183
    %v205 = vmul.f32 %v184, %v184
    %v206 = vmul.f32 %v185, %v185
    %v207 = vmul.f32 %v186, %v186
    %v208 = vmul.f32 %v187, %v187
    %v209 = vmul.f32 %v188, %v188
    %v210 = vmul.f32 %v189, %v189
    %v211 = vmul.f32 %v190, %v46
    %v212 = vmul.f32 %v191, %v47
    %v213 = vmul.f32 %v192, %v48
    %v214 = vmul.f32 %v193, %v46
    %v215 = vmul.f32 %v194, %v47
    %v216 = vmul.f32 %v195, %v48
    %v217 = vmul.f32 %v196, %v46
    %v218 = vmul.f32 %v197, %v47
    %v219 = vmul.f32 %v198, %v48
    %v220 = vmul.f32 %v199, %v46
    %v221 = vmul.f32 %v200, %v47
    %v222 = vmul.f32 %v201, %v48
    %v223 = vmul.f32 %v202, %v46
    %v224 = vmul.f32 %v203, %v47
    %v225 = vmul.f32 %v204, %v48
    %v226 = vmul.f32 %v205, %v46
    %v227 = vmul.f32 %v206, %v47
    %v228 = vmul.f32 %v207, %v48
    %v229 = vmul.f32 %v208, %v46
    %v230 = vmul.f32 %v209, %v47
    %v231 = vmul.f32 %v210, %v48
    %v232 = vadd.f32 %v211, %v212
    %vm233 = vcmask 261120
    %v234 = vsel %vm233, %v213, 0.0
    %v235 = vadd.f32 %v232, %v234
    %v236 = vadd.f32 %v235, %v214
    %v237 = vadd.f32 %v236, %v215
    %v238 = vsel %vm233, %v216, 0.0
    %v239 = vadd.f32 %v237, %v238
    %v240 = vadd.f32 %v239, %v217
    %v241 = vadd.f32 %v240, %v218
    %v242 = vsel %vm233, %v219, 0.0
    %v243 = vadd.f32 %v241, %v242
    %v244 = vadd.f32 %v243, %v220
    %v245 = vadd.f32 %v244, %v221
    %v246 = vsel %vm233, %v222, 0.0
    %v247 = vadd.f32 %v245, %v246
    %v248 = vadd.f32 %v247, %v223
    %v249 = vadd.f32 %v248, %v224
    %v250 = vsel %vm233, %v225, 0.0
    %v251 = vadd.f32 %v249, %v250
    %v252 = vadd.f32 %v251, %v226
    %v253 = vadd.f32 %v252, %v227
    %v254 = vsel %vm233, %v228, 0.0
    %v255 = vadd.f32 %v253, %v254
    %vm256 = vcmask 1042432
    %v257 = vsel %vm256, %v229, 0.0
    %v258 = vadd.f32 %v255, %v257
    %v259 = vsel %vm256, %v230, 0.0
    %v260 = vadd.f32 %v258, %v259
    %vm261 = vcmask 256000
    %v262 = vsel %vm261, %v231, 0.0
    %v263 = vadd.f32 %v260, %v262
    %264 = vadd.xlane.f32.xlu0 %v263
    %v265 = vpop.xlane.xlu0 %264
    %v266 = vrot.slane %v265, 4
    %v267 = vadd.f32 %v265, %v266
    %v268 = vrot.slane %v267, 2
    %v269 = vadd.f32 %v267, %v268
    %v270 = vrot.slane %v269, 1
    %v271 = vadd.f32 %v269, %v270
    %s272 = vtos %v271
    %v273 = vmax.f32 %v169, 0.0
    %v274 = vmax.f32 %v170, 0.0
    %v275 = vmax.f32 %v171, 0.0
    %v276 = vmax.f32 %v172, 0.0
    %v277 = vmax.f32 %v173, 0.0
    %v278 = vmax.f32 %v174, 0.0
    %v279 = vmax.f32 %v175, 0.0
    %v280 = vmax.f32 %v176, 0.0
    %v281 = vmax.f32 %v177, 0.0
    %v282 = vmax.f32 %v178, 0.0
    %v283 = vmax.f32 %v179, 0.0
    %v284 = vmax.f32 %v180, 0.0
    %v285 = vmax.f32 %v181, 0.0
    %v286 = vmax.f32 %v182, 0.0
    %v287 = vmax.f32 %v183, 0.0
    %v288 = vmax.f32 %v184, 0.0
    %v289 = vmax.f32 %v185, 0.0
    %v290 = vmax.f32 %v186, 0.0
    %v291 = vmax.f32 %v187, 0.0
    %v292 = vmax.f32 %v188, 0.0
    %v293 = vmax.f32 %v189, 0.0
    %v294 = vmul.f32 %v273, %v28
    %v295 = vmul.f32 %v274, %v29
    %v296 = vmul.f32 %v275, %v30
    %v297 = vmul.f32 %v276, %v28
    %v298 = vmul.f32 %v277, %v29
    %v299 = vmul.f32 %v278, %v30
    %v300 = vmul.f32 %v279, %v28
    %v301 = vmul.f32 %v280, %v29
    %v302 = vmul.f32 %v281, %v30
    %v303 = vmul.f32 %v282, %v28
    %v304 = vmul.f32 %v283, %v29
    %v305 = vmul.f32 %v284, %v30
    %v306 = vmul.f32 %v285, %v28
    %v307 = vmul.f32 %v286, %v29
    %v308 = vmul.f32 %v287, %v30
    %v309 = vmul.f32 %v288, %v28
    %v310 = vmul.f32 %v289, %v29
    %v311 = vmul.f32 %v290, %v30
    %v312 = vmul.f32 %v291, %v28
    %v313 = vmul.f32 %v292, %v29
    %v314 = vmul.f32 %v293, %v30
    %v315 = vadd.f32 %v294, %v295
    %v316 = vsel %vm233, %v296, 0.0
    %v317 = vadd.f32 %v315, %v316
    %v318 = vadd.f32 %v317, %v297
    %v319 = vadd.f32 %v318, %v298
    %v320 = vsel %vm233, %v299, 0.0
    %v321 = vadd.f32 %v319, %v320
    %v322 = vadd.f32 %v321, %v300
    %v323 = vadd.f32 %v322, %v301
    %v324 = vsel %vm233, %v302, 0.0
    %v325 = vadd.f32 %v323, %v324
    %v326 = vadd.f32 %v325, %v303
    %v327 = vadd.f32 %v326, %v304
    %v328 = vsel %vm233, %v305, 0.0
    %v329 = vadd.f32 %v327, %v328
    %v330 = vadd.f32 %v329, %v306
    %v331 = vadd.f32 %v330, %v307
    %v332 = vsel %vm233, %v308, 0.0
    %v333 = vadd.f32 %v331, %v332
    %v334 = vadd.f32 %v333, %v309
    %v335 = vadd.f32 %v334, %v310
    %v336 = vsel %vm233, %v311, 0.0
    %v337 = vadd.f32 %v335, %v336
    %v338 = vsel %vm256, %v312, 0.0
    %v339 = vadd.f32 %v337, %v338
    %v340 = vsel %vm256, %v313, 0.0
    %v341 = vadd.f32 %v339, %v340
    %v342 = vsel %vm261, %v314, 0.0
    %v343 = vadd.f32 %v341, %v342
    %344 = vadd.xlane.f32.xlu0 %v343
    %v345 = vpop.xlane.xlu0 %344
    %v346 = vrot.slane %v345, 4
    %v347 = vadd.f32 %v345, %v346
    %v348 = vrot.slane %v347, 2
    %v349 = vadd.f32 %v347, %v348
    %v350 = vrot.slane %v349, 1
    %v351 = vadd.f32 %v349, %v350
    %s352 = vtos %v351
    %vm353 = vcmp.lt.s32.totalorder %v10, 17
    %vm354 = vcmp.lt.s32.totalorder %v11, 17
    %vm355 = vcmp.lt.s32.totalorder %v12, 17
    %v356 = vsel %vm353, 1.0, 0.0
    %v357 = vsel %vm354, 1.0, 0.0
    %v358 = vsel %vm355, 1.0, 0.0
    %v359 = vadd.f32 %v356, 1.0
    %v360 = vadd.f32 %v357, 1.0
    %v361 = vadd.f32 %v358, 1.0
    %vm362 = vcmp.ge.s32.totalorder %v10, 255
    %vm363 = vcmp.ge.s32.totalorder %v11, 255
    %vm364 = vcmp.ge.s32.totalorder %v12, 255
    %v365 = vsel %vm362, 1.0, 0.0
    %v366 = vsel %vm363, 1.0, 0.0
    %v367 = vsel %vm364, 1.0, 0.0
    %v368 = vadd.f32 %v359, %v365
    %v369 = vadd.f32 %v360, %v366
    %v370 = vadd.f32 %v361, %v367
    %371 = vrot.lane.b32.xlu0 %v49, 111
    %v372 = vpop.permute.xlu0 %371
    %373 = vrot.lane.b32.xlu0 %v50, 111
    %v374 = vpop.permute.xlu0 %373
    %375 = vrot.lane.b32.xlu0 %v51, 111
    %v376 = vpop.permute.xlu0 %375
    %377 = vrot.lane.b32.xlu0 %v52, 111
    %v378 = vpop.permute.xlu0 %377
    %379 = vrot.lane.b32.xlu0 %v53, 111
    %v380 = vpop.permute.xlu0 %379
    %381 = vrot.lane.b32.xlu0 %v54, 111
    %v382 = vpop.permute.xlu0 %381
    %383 = vrot.lane.b32.xlu0 %v55, 111
    %v384 = vpop.permute.xlu0 %383
    %385 = vrot.lane.b32.xlu0 %v56, 111
    %v386 = vpop.permute.xlu0 %385
    %387 = vrot.lane.b32.xlu0 %v57, 111
    %v388 = vpop.permute.xlu0 %387
    %389 = vrot.lane.b32.xlu0 %v58, 111
    %v390 = vpop.permute.xlu0 %389
    %391 = vrot.lane.b32.xlu0 %v59, 111
    %v392 = vpop.permute.xlu0 %391
    %393 = vrot.lane.b32.xlu0 %v60, 111
    %v394 = vpop.permute.xlu0 %393
    %395 = vrot.lane.b32.xlu0 %v61, 111
    %v396 = vpop.permute.xlu0 %395
    %397 = vrot.lane.b32.xlu0 %v62, 111
    %v398 = vpop.permute.xlu0 %397
    %399 = vrot.lane.b32.xlu0 %v63, 111
    %v400 = vpop.permute.xlu0 %399
    %401 = vrot.lane.b32.xlu0 %v64, 111
    %v402 = vpop.permute.xlu0 %401
    %403 = vrot.lane.b32.xlu0 %v65, 111
    %v404 = vpop.permute.xlu0 %403
    %405 = vrot.lane.b32.xlu0 %v66, 111
    %v406 = vpop.permute.xlu0 %405
    %407 = vrot.lane.b32.xlu0 %v67, 111
    %v408 = vpop.permute.xlu0 %407
    %409 = vrot.lane.b32.xlu0 %v68, 111
    %v410 = vpop.permute.xlu0 %409
    %411 = vrot.lane.b32.xlu0 %v69, 111
    %v412 = vpop.permute.xlu0 %411
    %vm413 = vcmask 908288
    %v414 = vsel %vm413, %v372, %v374
    %v415 = vsel %vm413, %v374, %v376
    %v416 = vsel %vm413, %v378, %v380
    %v417 = vsel %vm413, %v380, %v382
    %v418 = vsel %vm413, %v384, %v386
    %v419 = vsel %vm413, %v386, %v388
    %v420 = vsel %vm413, %v390, %v392
    %v421 = vsel %vm413, %v392, %v394
    %v422 = vsel %vm413, %v396, %v398
    %v423 = vsel %vm413, %v398, %v400
    %v424 = vsel %vm413, %v402, %v404
    %v425 = vsel %vm413, %v404, %v406
    %v426 = vsel %vm413, %v408, %v410
    %v427 = vsel %vm413, %v410, %v412
    %v449 = vsub.f32 %v49, %v414
    %v450 = vsub.f32 %v50, %v415
    %v451 = vsub.f32 %v51, %v376
    %v452 = vsub.f32 %v52, %v416
    %v453 = vsub.f32 %v53, %v417
    %v454 = vsub.f32 %v54, %v382
    %v455 = vsub.f32 %v55, %v418
    %v456 = vsub.f32 %v56, %v419
    %v457 = vsub.f32 %v57, %v388
    %v458 = vsub.f32 %v58, %v420
    %v459 = vsub.f32 %v59, %v421
    %v460 = vsub.f32 %v60, %v394
    %v461 = vsub.f32 %v61, %v422
    %v462 = vsub.f32 %v62, %v423
    %v463 = vsub.f32 %v63, %v400
    %v464 = vsub.f32 %v64, %v424
    %v465 = vsub.f32 %v65, %v425
    %v466 = vsub.f32 %v66, %v406
    %v467 = vsub.f32 %v67, %v426
    %v468 = vsub.f32 %v68, %v427
    %v469 = vsub.f32 %v69, %v412
    %v470 = vmul.f32 %v449, %v449
    %v471 = vmul.f32 %v450, %v450
    %v472 = vmul.f32 %v451, %v451
    %v473 = vmul.f32 %v452, %v452
    %v474 = vmul.f32 %v453, %v453
    %v475 = vmul.f32 %v454, %v454
    %v476 = vmul.f32 %v455, %v455
    %v477 = vmul.f32 %v456, %v456
    %v478 = vmul.f32 %v457, %v457
    %v479 = vmul.f32 %v458, %v458
    %v480 = vmul.f32 %v459, %v459
    %v481 = vmul.f32 %v460, %v460
    %v482 = vmul.f32 %v461, %v461
    %v483 = vmul.f32 %v462, %v462
    %v484 = vmul.f32 %v463, %v463
    %v485 = vmul.f32 %v464, %v464
    %v486 = vmul.f32 %v465, %v465
    %v487 = vmul.f32 %v466, %v466
    %v488 = vmul.f32 %v467, %v467
    %v489 = vmul.f32 %v468, %v468
    %v490 = vmul.f32 %v469, %v469
    %v491 = vmul.f32 %v470, %v368
    %v492 = vmul.f32 %v471, %v369
    %v493 = vmul.f32 %v472, %v370
    %v494 = vmul.f32 %v473, %v368
    %v495 = vmul.f32 %v474, %v369
    %v496 = vmul.f32 %v475, %v370
    %v497 = vmul.f32 %v476, %v368
    %v498 = vmul.f32 %v477, %v369
    %v499 = vmul.f32 %v478, %v370
    %v500 = vmul.f32 %v479, %v368
    %v501 = vmul.f32 %v480, %v369
    %v502 = vmul.f32 %v481, %v370
    %v503 = vmul.f32 %v482, %v368
    %v504 = vmul.f32 %v483, %v369
    %v505 = vmul.f32 %v484, %v370
    %v506 = vmul.f32 %v485, %v368
    %v507 = vmul.f32 %v486, %v369
    %v508 = vmul.f32 %v487, %v370
    %v509 = vmul.f32 %v488, %v368
    %v510 = vmul.f32 %v489, %v369
    %v511 = vmul.f32 %v490, %v370
    %v512 = vadd.f32 %v491, %v492
    %vm513 = vcmask 130048
    %v514 = vsel %vm513, %v493, 0.0
    %v515 = vadd.f32 %v512, %v514
    %v516 = vadd.f32 %v515, %v494
    %v517 = vadd.f32 %v516, %v495
    %v518 = vsel %vm513, %v496, 0.0
    %v519 = vadd.f32 %v517, %v518
    %v520 = vadd.f32 %v519, %v497
    %v521 = vadd.f32 %v520, %v498
    %v522 = vsel %vm513, %v499, 0.0
    %v523 = vadd.f32 %v521, %v522
    %v524 = vadd.f32 %v523, %v500
    %v525 = vadd.f32 %v524, %v501
    %v526 = vsel %vm513, %v502, 0.0
    %v527 = vadd.f32 %v525, %v526
    %v528 = vadd.f32 %v527, %v503
    %v529 = vadd.f32 %v528, %v504
    %v530 = vsel %vm513, %v505, 0.0
    %v531 = vadd.f32 %v529, %v530
    %v532 = vadd.f32 %v531, %v506
    %v533 = vadd.f32 %v532, %v507
    %v534 = vsel %vm513, %v508, 0.0
    %v535 = vadd.f32 %v533, %v534
    %v536 = vsel %vm256, %v509, 0.0
    %v537 = vadd.f32 %v535, %v536
    %v538 = vsel %vm256, %v510, 0.0
    %v539 = vadd.f32 %v537, %v538
    %vm540 = vcmask 124928
    %v541 = vsel %vm540, %v511, 0.0
    %v542 = vadd.f32 %v539, %v541
    %543 = vadd.xlane.f32.xlu0 %v542
    %v544 = vpop.xlane.xlu0 %543
    %v545 = vrot.slane %v544, 4
    %v546 = vadd.f32 %v544, %v545
    %v547 = vrot.slane %v546, 2
    %v548 = vadd.f32 %v546, %v547
    %v549 = vrot.slane %v548, 1
    %v550 = vadd.f32 %v548, %v549
    %s551 = vtos %v550
    %s552 = sadd.f32 %s272, %s551
    %v553 = vmax.f32 %v449, 0.0
    %v554 = vmax.f32 %v450, 0.0
    %v555 = vmax.f32 %v451, 0.0
    %v556 = vmax.f32 %v452, 0.0
    %v557 = vmax.f32 %v453, 0.0
    %v558 = vmax.f32 %v454, 0.0
    %v559 = vmax.f32 %v455, 0.0
    %v560 = vmax.f32 %v456, 0.0
    %v561 = vmax.f32 %v457, 0.0
    %v562 = vmax.f32 %v458, 0.0
    %v563 = vmax.f32 %v459, 0.0
    %v564 = vmax.f32 %v460, 0.0
    %v565 = vmax.f32 %v461, 0.0
    %v566 = vmax.f32 %v462, 0.0
    %v567 = vmax.f32 %v463, 0.0
    %v568 = vmax.f32 %v464, 0.0
    %v569 = vmax.f32 %v465, 0.0
    %v570 = vmax.f32 %v466, 0.0
    %v571 = vmax.f32 %v467, 0.0
    %v572 = vmax.f32 %v468, 0.0
    %v573 = vmax.f32 %v469, 0.0
    %v574 = vadd.f32 %v553, %v554
    %v575 = vsel %vm513, %v555, 0.0
    %v576 = vadd.f32 %v574, %v575
    %v577 = vadd.f32 %v576, %v556
    %v578 = vadd.f32 %v577, %v557
    %v579 = vsel %vm513, %v558, 0.0
    %v580 = vadd.f32 %v578, %v579
    %v581 = vadd.f32 %v580, %v559
    %v582 = vadd.f32 %v581, %v560
    %v583 = vsel %vm513, %v561, 0.0
    %v584 = vadd.f32 %v582, %v583
    %v585 = vadd.f32 %v584, %v562
    %v586 = vadd.f32 %v585, %v563
    %v587 = vsel %vm513, %v564, 0.0
    %v588 = vadd.f32 %v586, %v587
    %v589 = vadd.f32 %v588, %v565
    %v590 = vadd.f32 %v589, %v566
    %v591 = vsel %vm513, %v567, 0.0
    %v592 = vadd.f32 %v590, %v591
    %v593 = vadd.f32 %v592, %v568
    %v594 = vadd.f32 %v593, %v569
    %v595 = vsel %vm513, %v570, 0.0
    %v596 = vadd.f32 %v594, %v595
    %v597 = vsel %vm256, %v571, 0.0
    %v598 = vadd.f32 %v596, %v597
    %v599 = vsel %vm256, %v572, 0.0
    %v600 = vadd.f32 %v598, %v599
    %v601 = vsel %vm540, %v573, 0.0
    %v602 = vadd.f32 %v600, %v601
    %603 = vadd.xlane.f32.xlu0 %v602
    %v604 = vpop.xlane.xlu0 %603
    %v605 = vrot.slane %v604, 4
    %v606 = vadd.f32 %v604, %v605
    %v607 = vrot.slane %v606, 2
    %v608 = vadd.f32 %v606, %v607
    %v609 = vrot.slane %v608, 1
    %v610 = vadd.f32 %v608, %v609
    %s611 = vtos %v610
    %s612 = sadd.f32 %s352, %s611
    %v613 = vlaneseq
    %v614 = vshrl.u32 %v613, 7
    %v615 = vadd.s32 %v614, 8
    %v616 = vadd.s32 %v614, 16
    %v617 = vadd.s32 %v614, 24
    %v618 = vadd.s32 %v614, 32
    %v619 = vadd.s32 %v614, 40
    %v620 = vadd.s32 %v614, 48
    %v621 = vmul.u32 %v614, 3856
    %v622 = vmul.u32 %v615, 3856
    %v623 = vmul.u32 %v616, 3856
    %v624 = vmul.u32 %v617, 3856
    %v625 = vmul.u32 %v618, 3856
    %v626 = vmul.u32 %v619, 3856
    %v627 = vmul.u32 %v620, 3856
    %v628 = vshra.s32 %v621, 16
    %v629 = vshra.s32 %v622, 16
    %v630 = vshra.s32 %v623, 16
    %v631 = vshra.s32 %v624, 16
    %v632 = vshra.s32 %v625, 16
    %v633 = vshra.s32 %v626, 16
    %v634 = vshra.s32 %v627, 16
    %v635 = vmul.u32 %v628, 17
    %v636 = vmul.u32 %v629, 17
    %v637 = vmul.u32 %v630, 17
    %v638 = vmul.u32 %v631, 17
    %v639 = vmul.u32 %v632, 17
    %v640 = vmul.u32 %v633, 17
    %v641 = vmul.u32 %v634, 17
    %v642 = vsub.s32 %v614, %v635
    %v643 = vsub.s32 %v615, %v636
    %v644 = vsub.s32 %v616, %v637
    %v645 = vsub.s32 %v617, %v638
    %v646 = vsub.s32 %v618, %v639
    %v647 = vsub.s32 %v619, %v640
    %v648 = vsub.s32 %v620, %v641
    %vm649 = vcmp.eq.s32.totalorder %v642, 16
    %vm650 = vcmp.eq.s32.totalorder %v643, 16
    %vm651 = vcmp.eq.s32.totalorder %v644, 16
    %vm652 = vcmp.eq.s32.totalorder %v645, 16
    %vm653 = vcmp.eq.s32.totalorder %v646, 16
    %vm654 = vcmp.eq.s32.totalorder %v647, 16
    %vm655 = vcmp.eq.s32.totalorder %v648, 16
    %v656 = vsel %vm649, 0.0, 1.0
    %v657 = vsel %vm650, 0.0, 1.0
    %v658 = vsel %vm651, 0.0, 1.0
    %v659 = vsel %vm652, 0.0, 1.0
    %v660 = vsel %vm653, 0.0, 1.0
    %v661 = vsel %vm654, 0.0, 1.0
    %v662 = vsel %vm655, 0.0, 1.0
    %vm663 = vcmp.eq.s32.totalorder %v642, 0
    %vm664 = vcmp.eq.s32.totalorder %v643, 0
    %vm665 = vcmp.eq.s32.totalorder %v644, 0
    %vm666 = vcmp.eq.s32.totalorder %v645, 0
    %vm667 = vcmp.eq.s32.totalorder %v646, 0
    %vm668 = vcmp.eq.s32.totalorder %v647, 0
    %vm669 = vcmp.eq.s32.totalorder %v648, 0
    %v670 = vsel %vm663, 1.0, 0.0
    %v671 = vsel %vm664, 1.0, 0.0
    %v672 = vsel %vm665, 1.0, 0.0
    %v673 = vsel %vm666, 1.0, 0.0
    %v674 = vsel %vm667, 1.0, 0.0
    %v675 = vsel %vm668, 1.0, 0.0
    %v676 = vsel %vm669, 1.0, 0.0
    %v677 = vadd.f32 %v656, %v670
    %v678 = vadd.f32 %v657, %v671
    %v679 = vadd.f32 %v658, %v672
    %v680 = vadd.f32 %v659, %v673
    %v681 = vadd.f32 %v660, %v674
    %v682 = vadd.f32 %v661, %v675
    %v683 = vadd.f32 %v662, %v676
    %vm684 = vcmp.eq.s32.totalorder %v642, 15
    %vm685 = vcmp.eq.s32.totalorder %v643, 15
    %vm686 = vcmp.eq.s32.totalorder %v644, 15
    %vm687 = vcmp.eq.s32.totalorder %v645, 15
    %vm688 = vcmp.eq.s32.totalorder %v646, 15
    %vm689 = vcmp.eq.s32.totalorder %v647, 15
    %vm690 = vcmp.eq.s32.totalorder %v648, 15
    %v691 = vsel %vm684, 1.0, 0.0
    %v692 = vsel %vm685, 1.0, 0.0
    %v693 = vsel %vm686, 1.0, 0.0
    %v694 = vsel %vm687, 1.0, 0.0
    %v695 = vsel %vm688, 1.0, 0.0
    %v696 = vsel %vm689, 1.0, 0.0
    %v697 = vsel %vm690, 1.0, 0.0
    %v698 = vadd.f32 %v677, %v691
    %v699 = vadd.f32 %v678, %v692
    %v700 = vadd.f32 %v679, %v693
    %v701 = vadd.f32 %v680, %v694
    %v702 = vadd.f32 %v681, %v695
    %v703 = vadd.f32 %v682, %v696
    %v704 = vadd.f32 %v683, %v697
    %v705 = vld [vmem:[%s0 + $0x90] sm:$0x3]
    %v706 = vld [vmem:[%s0 + $0x98] sm:$0x3]
    %v707 = vld [vmem:[%s0 + $0xa0] sm:$0x3]
    %v708 = vld [vmem:[%s0] sm:$0xfe]
    %v709 = vld [vmem:[%s0 + $0x8] sm:$0xfe]
    %v710 = vld [vmem:[%s0 + $0x10] sm:$0xfe]
    %vm714 = vcmask 1046528
    %v715 = vrot.slane %v708, 1
    %v716 = vrot.slane %v52, 1
    %v717 = vsel %vm714, %v715, %v716
    %v718 = vrot.slane %v709, 1
    %v719 = vrot.slane %v53, 1
    %v720 = vsel %vm714, %v718, %v719
    %v721 = vrot.slane %v710, 1
    %v722 = vrot.slane %v54, 1
    %v723 = vsel %vm714, %v721, %v722
    %v724 = vrot.slane %v55, 1
    %v725 = vsel %vm714, %v716, %v724
    %v726 = vrot.slane %v56, 1
    %v727 = vsel %vm714, %v719, %v726
    %v728 = vrot.slane %v57, 1
    %v729 = vsel %vm714, %v722, %v728
    %v730 = vrot.slane %v58, 1
    %v731 = vsel %vm714, %v724, %v730
    %v732 = vrot.slane %v59, 1
    %v733 = vsel %vm714, %v726, %v732
    %v734 = vrot.slane %v60, 1
    %v735 = vsel %vm714, %v728, %v734
    %v736 = vrot.slane %v61, 1
    %v737 = vsel %vm714, %v730, %v736
    %v738 = vrot.slane %v62, 1
    %v739 = vsel %vm714, %v732, %v738
    %v740 = vrot.slane %v63, 1
    %v741 = vsel %vm714, %v734, %v740
    %v742 = vrot.slane %v64, 1
    %v743 = vsel %vm714, %v736, %v742
    %v744 = vrot.slane %v65, 1
    %v745 = vsel %vm714, %v738, %v744
    %v746 = vrot.slane %v66, 1
    %v747 = vsel %vm714, %v740, %v746
    %v748 = vrot.slane %v67, 1
    %v749 = vsel %vm714, %v742, %v748
    %v750 = vrot.slane %v68, 1
    %v751 = vsel %vm714, %v744, %v750
    %v752 = vrot.slane %v69, 1
    %v753 = vsel %vm714, %v746, %v752
    %v775 = vsub.f32 %v49, %v717
    %v776 = vsub.f32 %v50, %v720
    %v777 = vsub.f32 %v51, %v723
    %v778 = vsub.f32 %v52, %v725
    %v779 = vsub.f32 %v53, %v727
    %v780 = vsub.f32 %v54, %v729
    %v781 = vsub.f32 %v55, %v731
    %v782 = vsub.f32 %v56, %v733
    %v783 = vsub.f32 %v57, %v735
    %v784 = vsub.f32 %v58, %v737
    %v785 = vsub.f32 %v59, %v739
    %v786 = vsub.f32 %v60, %v741
    %v787 = vsub.f32 %v61, %v743
    %v788 = vsub.f32 %v62, %v745
    %v789 = vsub.f32 %v63, %v747
    %v790 = vsub.f32 %v64, %v749
    %v791 = vsub.f32 %v65, %v751
    %v792 = vsub.f32 %v66, %v753
    %v793 = vsub.f32 %v705, %v748
    %v794 = vsub.f32 %v706, %v750
    %v795 = vsub.f32 %v707, %v752
    %v796 = vmul.f32 %v775, %v775
    %v797 = vmul.f32 %v776, %v776
    %v798 = vmul.f32 %v777, %v777
    %v799 = vmul.f32 %v778, %v778
    %v800 = vmul.f32 %v779, %v779
    %v801 = vmul.f32 %v780, %v780
    %v802 = vmul.f32 %v781, %v781
    %v803 = vmul.f32 %v782, %v782
    %v804 = vmul.f32 %v783, %v783
    %v805 = vmul.f32 %v784, %v784
    %v806 = vmul.f32 %v785, %v785
    %v807 = vmul.f32 %v786, %v786
    %v808 = vmul.f32 %v787, %v787
    %v809 = vmul.f32 %v788, %v788
    %v810 = vmul.f32 %v789, %v789
    %v811 = vmul.f32 %v790, %v790
    %v812 = vmul.f32 %v791, %v791
    %v813 = vmul.f32 %v792, %v792
    %v814 = vmul.f32 %v793, %v793
    %v815 = vmul.f32 %v794, %v794
    %v816 = vmul.f32 %v795, %v795
    %v817 = vmul.f32 %v796, %v698
    %v818 = vmul.f32 %v797, %v698
    %v819 = vmul.f32 %v798, %v698
    %v820 = vmul.f32 %v799, %v699
    %v821 = vmul.f32 %v800, %v699
    %v822 = vmul.f32 %v801, %v699
    %v823 = vmul.f32 %v802, %v700
    %v824 = vmul.f32 %v803, %v700
    %v825 = vmul.f32 %v804, %v700
    %v826 = vmul.f32 %v805, %v701
    %v827 = vmul.f32 %v806, %v701
    %v828 = vmul.f32 %v807, %v701
    %v829 = vmul.f32 %v808, %v702
    %v830 = vmul.f32 %v809, %v702
    %v831 = vmul.f32 %v810, %v702
    %v832 = vmul.f32 %v811, %v703
    %v833 = vmul.f32 %v812, %v703
    %v834 = vmul.f32 %v813, %v703
    %v835 = vmul.f32 %v814, %v704
    %v836 = vmul.f32 %v815, %v704
    %v837 = vmul.f32 %v816, %v704
    %v838 = vadd.f32 %v817, %v818
    %vm839 = vcmask 269312
    %v840 = vsel %vm839, %v819, 0.0
    %v841 = vadd.f32 %v838, %v840
    %v842 = vadd.f32 %v841, %v820
    %v843 = vadd.f32 %v842, %v821
    %v844 = vsel %vm839, %v822, 0.0
    %v845 = vadd.f32 %v843, %v844
    %v846 = vadd.f32 %v845, %v823
    %v847 = vadd.f32 %v846, %v824
    %v848 = vsel %vm839, %v825, 0.0
    %v849 = vadd.f32 %v847, %v848
    %v850 = vadd.f32 %v849, %v826
    %v851 = vadd.f32 %v850, %v827
    %v852 = vsel %vm839, %v828, 0.0
    %v853 = vadd.f32 %v851, %v852
    %v854 = vadd.f32 %v853, %v829
    %v855 = vadd.f32 %v854, %v830
    %v856 = vsel %vm839, %v831, 0.0
    %v857 = vadd.f32 %v855, %v856
    %v858 = vadd.f32 %v857, %v832
    %v859 = vadd.f32 %v858, %v833
    %v860 = vsel %vm839, %v834, 0.0
    %v861 = vadd.f32 %v859, %v860
    %vm862 = vcmask 1041408
    %v863 = vsel %vm862, %v835, 0.0
    %v864 = vadd.f32 %v861, %v863
    %v865 = vsel %vm862, %v836, 0.0
    %v866 = vadd.f32 %v864, %v865
    %vm867 = vcmask 263168
    %v868 = vsel %vm867, %v837, 0.0
    %v869 = vadd.f32 %v866, %v868
    %870 = vadd.xlane.f32.xlu0 %v869
    %v871 = vpop.xlane.xlu0 %870
    %v872 = vrot.slane %v871, 4
    %v873 = vadd.f32 %v871, %v872
    %v874 = vrot.slane %v873, 2
    %v875 = vadd.f32 %v873, %v874
    %v876 = vrot.slane %v875, 1
    %v877 = vadd.f32 %v875, %v876
    %s878 = vtos %v877
    %s879 = sadd.f32 %s552, %s878
    %v880 = vmax.f32 %v775, 0.0
    %v881 = vmax.f32 %v776, 0.0
    %v882 = vmax.f32 %v777, 0.0
    %v883 = vmax.f32 %v778, 0.0
    %v884 = vmax.f32 %v779, 0.0
    %v885 = vmax.f32 %v780, 0.0
    %v886 = vmax.f32 %v781, 0.0
    %v887 = vmax.f32 %v782, 0.0
    %v888 = vmax.f32 %v783, 0.0
    %v889 = vmax.f32 %v784, 0.0
    %v890 = vmax.f32 %v785, 0.0
    %v891 = vmax.f32 %v786, 0.0
    %v892 = vmax.f32 %v787, 0.0
    %v893 = vmax.f32 %v788, 0.0
    %v894 = vmax.f32 %v789, 0.0
    %v895 = vmax.f32 %v790, 0.0
    %v896 = vmax.f32 %v791, 0.0
    %v897 = vmax.f32 %v792, 0.0
    %v898 = vmax.f32 %v793, 0.0
    %v899 = vmax.f32 %v794, 0.0
    %v900 = vmax.f32 %v795, 0.0
    %v901 = vmul.f32 %v880, %v656
    %v902 = vmul.f32 %v881, %v656
    %v903 = vmul.f32 %v882, %v656
    %v904 = vmul.f32 %v883, %v657
    %v905 = vmul.f32 %v884, %v657
    %v906 = vmul.f32 %v885, %v657
    %v907 = vmul.f32 %v886, %v658
    %v908 = vmul.f32 %v887, %v658
    %v909 = vmul.f32 %v888, %v658
    %v910 = vmul.f32 %v889, %v659
    %v911 = vmul.f32 %v890, %v659
    %v912 = vmul.f32 %v891, %v659
    %v913 = vmul.f32 %v892, %v660
    %v914 = vmul.f32 %v893, %v660
    %v915 = vmul.f32 %v894, %v660
    %v916 = vmul.f32 %v895, %v661
    %v917 = vmul.f32 %v896, %v661
    %v918 = vmul.f32 %v897, %v661
    %v919 = vmul.f32 %v898, %v662
    %v920 = vmul.f32 %v899, %v662
    %v921 = vmul.f32 %v900, %v662
    %v922 = vadd.f32 %v901, %v902
    %v923 = vsel %vm839, %v903, 0.0
    %v924 = vadd.f32 %v922, %v923
    %v925 = vadd.f32 %v924, %v904
    %v926 = vadd.f32 %v925, %v905
    %v927 = vsel %vm839, %v906, 0.0
    %v928 = vadd.f32 %v926, %v927
    %v929 = vadd.f32 %v928, %v907
    %v930 = vadd.f32 %v929, %v908
    %v931 = vsel %vm839, %v909, 0.0
    %v932 = vadd.f32 %v930, %v931
    %v933 = vadd.f32 %v932, %v910
    %v934 = vadd.f32 %v933, %v911
    %v935 = vsel %vm839, %v912, 0.0
    %v936 = vadd.f32 %v934, %v935
    %v937 = vadd.f32 %v936, %v913
    %v938 = vadd.f32 %v937, %v914
    %v939 = vsel %vm839, %v915, 0.0
    %v940 = vadd.f32 %v938, %v939
    %v941 = vadd.f32 %v940, %v916
    %v942 = vadd.f32 %v941, %v917
    %v943 = vsel %vm839, %v918, 0.0
    %v944 = vadd.f32 %v942, %v943
    %v945 = vsel %vm862, %v919, 0.0
    %v946 = vadd.f32 %v944, %v945
    %v947 = vsel %vm862, %v920, 0.0
    %v948 = vadd.f32 %v946, %v947
    %v949 = vsel %vm867, %v921, 0.0
    %v950 = vadd.f32 %v948, %v949
    %951 = vadd.xlane.f32.xlu0 %v950
    %v952 = vpop.xlane.xlu0 %951
    %v953 = vrot.slane %v952, 4
    %v954 = vadd.f32 %v952, %v953
    %v955 = vrot.slane %v954, 2
    %v956 = vadd.f32 %v954, %v955
    %v957 = vrot.slane %v956, 1
    %v958 = vadd.f32 %v956, %v957
    %s959 = vtos %v958
    %s960 = sadd.f32 %s612, %s959
    %s961 = smul.f32 %s879, 7.2087656e-05
    %s962 = scalar_lea.smem [#allocation2], 0
    %963 = sst [smem:[%s962]] %s961
    %s964 = smul.f32 %s960, 7.2087656e-05
    %s965 = scalar_lea.smem [#allocation2], 1
    %966 = sst [smem:[%s965]] %s964
    // Predicated region
    $region6: #{tv_3d_lut_forward.1} parent=1 // pred_check
      _
    $region7: #{tv_3d_lut_forward.1} parent=1 // pred_check_branch
      %968 = sbr.rel (0) target = $region9
    $region8: #{tv_3d_lut_forward.1} parent=1 // pred_region
      %970 = vsyncadd [#allocation3], 0
      %s972 = sshll.u32 %s1, 4
      %s973 = int_to_ptr.vmem [resolvable:$true] %s972
      %975 = dma.smem_to_vmem [#allocation2], 16, %s973, [#allocation3]
    $region9: #{tv_3d_lut_forward.1} parent=1 // pred_fallthru
      _
    // Predicated region
    $region10: #{tv_3d_lut_forward.1} parent=1 // pred_check
      _
    $region11: #{tv_3d_lut_forward.1} parent=1 // pred_check_branch
      %977 = sbr.rel (0) target = $region13
    $region12: #{tv_3d_lut_forward.1} parent=1 // pred_region
      %979 = dma.done [#allocation3], 16
    $region13: #{tv_3d_lut_forward.1} parent=1 // pred_fallthru
      _
    %980 = sfence
    %981 = vsyncpa [#allocation3], 1

</llo_original>
